<compile_context>
chip_gen: v7x
topology: tpu7x:2x2x1
jax: 0.10.0
libtpu: 0.0.40
codegen_flags: <defaults>
</compile_context>

<pallas_src>
import jax
import jax.numpy as jnp
from jax.experimental import pallas as pl
from jax.experimental.pallas import tpu as pltpu  # noqa: F401  (TPU backend import)

INPUT_DIM = 32
HIDDEN_DIM = 32          # must equal INPUT_DIM for matmul(qkv, query^T) to be valid
DROPOUT_P = 0.2
SCALE = float(HIDDEN_DIM) ** (-1)


def attn_kernel(q_ref, kv_ref, w1t_ref, b1_ref, w2t_ref, b2_ref, u_ref, o_ref):
    # q_ref/kv_ref: (B*S, D) flattened inputs; w1t: (D, D); w2t: (D, H)
    # b1: (1, D); b2: (1, H); u: (B, S, S) host-generated uniforms; o: (B, S, H)
    B, S, _ = u_ref.shape

    # Projections as single big matmuls (weights pre-transposed on host).
    qp = jnp.dot(q_ref[...], w1t_ref[...],
                 preferred_element_type=jnp.float32) + b1_ref[...]
    kvp = jnp.dot(kv_ref[...], w2t_ref[...],
                  preferred_element_type=jnp.float32) + b2_ref[...]

    qp3 = qp.reshape(B, S, -1)     # (B, S, D)
    kvp3 = kvp.reshape(B, S, -1)   # (B, S, H)

    # dot = kvp @ qp^T per batch, without materializing a transpose.
    dot = jnp.einsum('bij,bkj->bik', kvp3, qp3,
                     preferred_element_type=jnp.float32)
    scaled = dot * SCALE

    # softmax over last dim; fold the dropout 1/(1-p) rescale into the
    # normalization so there is only one full-tile multiply.
    m = jnp.max(scaled, axis=-1, keepdims=True)
    e = jnp.exp(scaled - m)
    denom = jnp.sum(e, axis=-1, keepdims=True)
    inv = (1.0 / (1.0 - DROPOUT_P)) / denom

    keep = u_ref[...] >= DROPOUT_P
    attn = jnp.where(keep, e * inv, 0.0)

    # output = attn @ kvp  -> (B, S, H)
    o_ref[...] = jnp.einsum('bij,bjk->bik', attn, kvp3,
                            preferred_element_type=jnp.float32)


def model_forward(query, key_value, w1, b1, w2, b2, dropout_key):
    B, S, D = query.shape
    H = w2.shape[0]

    # Host-side prep: flatten batch into rows, pre-transpose weights,
    # draw the dropout uniforms once for the whole (B, S, S) attention map.
    q2 = query.reshape(B * S, D)
    kv2 = key_value.reshape(B * S, D)
    u = jax.random.uniform(dropout_key, (B, S, S), dtype=jnp.float32)

    # Single kernel invocation (no grid): everything lives in VMEM, zero
    # per-step pipeline overhead. At this size no tiling is needed.
    return pl.pallas_call(
        attn_kernel,
        out_shape=jax.ShapeDtypeStruct((B, S, H), jnp.float32),
    )(q2, kv2, w1.T, b1.reshape(1, D), w2.T, b2.reshape(1, H), u)


if __name__ == "__main__":
    key = jax.random.PRNGKey(0)
    k_q, k_kv, k_w1, k_b1, k_w2, k_b2, k_drop = jax.random.split(key, 7)

    B, S = 2, 16
    query = jax.random.uniform(k_q, (B, S, INPUT_DIM), dtype=jnp.float32)
    key_value = jax.random.uniform(k_kv, (B, S, INPUT_DIM), dtype=jnp.float32)

    # Deterministic "Linear" parameters (PyTorch-style (out, in) weights).
    bound1 = 1.0 / (INPUT_DIM ** 0.5)
    w1 = jax.random.uniform(k_w1, (INPUT_DIM, INPUT_DIM), jnp.float32, -bound1, bound1)
    b1 = jax.random.uniform(k_b1, (INPUT_DIM,), jnp.float32, -bound1, bound1)
    w2 = jax.random.uniform(k_w2, (HIDDEN_DIM, INPUT_DIM), jnp.float32, -bound1, bound1)
    b2 = jax.random.uniform(k_b2, (HIDDEN_DIM,), jnp.float32, -bound1, bound1)

    out = model_forward(query, key_value, w1, b1, w2, b2, k_drop)
    jax.block_until_ready(out)
    assert out.shape == (B, S, HIDDEN_DIM)
    assert bool(jnp.all(jnp.isfinite(out)))
    print("KERNEL_OK")
</pallas_src>

<mosaic_0001>
module attributes {stable_mosaic.version = 11 : i64} {
  func.func @attn_kernel(%arg0: memref<32x32xf32, #tpu.memory_space<vmem>>, %arg1: memref<32x32xf32, #tpu.memory_space<vmem>>, %arg2: memref<32x32xf32, #tpu.memory_space<vmem>>, %arg3: memref<1x32xf32, #tpu.memory_space<vmem>>, %arg4: memref<32x32xf32, #tpu.memory_space<vmem>>, %arg5: memref<1x32xf32, #tpu.memory_space<vmem>>, %arg6: memref<2x16x16xf32, #tpu.memory_space<vmem>>, %arg7: memref<2x16x32xf32, #tpu.memory_space<vmem>>) attributes {dimension_semantics = [], scalar_prefetch = 0 : i64, scratch_operands = 0 : i64, tpu.core_type = #tpu.core_type<tc>} {
    %c0 = arith.constant 0 : index
    %c0_0 = arith.constant 0 : index
    %0 = vector.load %arg0[%c0, %c0_0] : memref<32x32xf32, #tpu.memory_space<vmem>>, vector<32x32xf32>
    %c0_1 = arith.constant 0 : index
    %c0_2 = arith.constant 0 : index
    %1 = vector.load %arg2[%c0_1, %c0_2] : memref<32x32xf32, #tpu.memory_space<vmem>>, vector<32x32xf32>
    %cst = arith.constant dense<0.000000e+00> : vector<32x32xf32>
    %2 = tpu.matmul %0, %1, %cst {dimension_numbers = #tpu.dot_dimension_numbers<[1], [0], [0], [1], [0, 0, 1, 1], [], []>} : vector<32x32xf32>, vector<32x32xf32>, vector<32x32xf32> -> vector<32x32xf32>
    %c0_3 = arith.constant 0 : index
    %c0_4 = arith.constant 0 : index
    %3 = vector.load %arg3[%c0_3, %c0_4] : memref<1x32xf32, #tpu.memory_space<vmem>>, vector<1x32xf32>
    %4 = vector.broadcast %3 : vector<1x32xf32> to vector<32x32xf32>
    %5 = arith.addf %2, %4 : vector<32x32xf32>
    %c0_5 = arith.constant 0 : index
    %c0_6 = arith.constant 0 : index
    %6 = vector.load %arg1[%c0_5, %c0_6] : memref<32x32xf32, #tpu.memory_space<vmem>>, vector<32x32xf32>
    %c0_7 = arith.constant 0 : index
    %c0_8 = arith.constant 0 : index
    %7 = vector.load %arg4[%c0_7, %c0_8] : memref<32x32xf32, #tpu.memory_space<vmem>>, vector<32x32xf32>
    %cst_9 = arith.constant dense<0.000000e+00> : vector<32x32xf32>
    %8 = tpu.matmul %6, %7, %cst_9 {dimension_numbers = #tpu.dot_dimension_numbers<[1], [0], [0], [1], [0, 0, 1, 1], [], []>} : vector<32x32xf32>, vector<32x32xf32>, vector<32x32xf32> -> vector<32x32xf32>
    %c0_10 = arith.constant 0 : index
    %c0_11 = arith.constant 0 : index
    %9 = vector.load %arg5[%c0_10, %c0_11] : memref<1x32xf32, #tpu.memory_space<vmem>>, vector<1x32xf32>
    %10 = vector.broadcast %9 : vector<1x32xf32> to vector<32x32xf32>
    %11 = arith.addf %8, %10 : vector<32x32xf32>
    %12 = vector.shape_cast %5 : vector<32x32xf32> to vector<2x16x32xf32>
    %13 = vector.shape_cast %11 : vector<32x32xf32> to vector<2x16x32xf32>
    "tpu.trace_start"() <{level = 10 : i32, message = "bij,bkj->bik"}> : () -> ()
    %cst_12 = arith.constant dense<0.000000e+00> : vector<2x16x16xf32>
    %14 = tpu.matmul %13, %12, %cst_12 {dimension_numbers = #tpu.dot_dimension_numbers<[2], [2], [1], [1], [0, 0, 0, 1, 1, 1], [0], [0]>} : vector<2x16x32xf32>, vector<2x16x32xf32>, vector<2x16x16xf32> -> vector<2x16x16xf32>
    "tpu.trace_stop"() : () -> ()
    %cst_13 = arith.constant 3.125000e-02 : f32
    %15 = vector.broadcast %cst_13 : f32 to vector<2x16x16xf32>
    %16 = arith.mulf %14, %15 : vector<2x16x16xf32>
    %cst_14 = arith.constant dense<0xFF800000> : vector<2x16xf32>
    %17 = vector.multi_reduction <maximumf>, %16, %cst_14 [2] : vector<2x16x16xf32> to vector<2x16xf32>
    %18 = vector.shape_cast %17 : vector<2x16xf32> to vector<2x16x1xf32>
    %19 = vector.broadcast %18 : vector<2x16x1xf32> to vector<2x16x16xf32>
    %20 = arith.subf %16, %19 : vector<2x16x16xf32>
    %21 = math.exp %20 : vector<2x16x16xf32>
    %cst_15 = arith.constant dense<0.000000e+00> : vector<2x16xf32>
    %22 = vector.multi_reduction <add>, %21, %cst_15 [2] : vector<2x16x16xf32> to vector<2x16xf32>
    %23 = vector.shape_cast %22 : vector<2x16xf32> to vector<2x16x1xf32>
    %cst_16 = arith.constant 1.250000e+00 : f32
    %24 = vector.broadcast %cst_16 : f32 to vector<2x16x1xf32>
    %25 = arith.divf %24, %23 : vector<2x16x1xf32>
    %c0_17 = arith.constant 0 : index
    %c0_18 = arith.constant 0 : index
    %c0_19 = arith.constant 0 : index
    %26 = vector.load %arg6[%c0_17, %c0_18, %c0_19] : memref<2x16x16xf32, #tpu.memory_space<vmem>>, vector<2x16x16xf32>
    %cst_20 = arith.constant 2.000000e-01 : f32
    %27 = vector.broadcast %cst_20 : f32 to vector<2x16x16xf32>
    %28 = arith.cmpf oge, %26, %27 : vector<2x16x16xf32>
    %29 = vector.broadcast %25 : vector<2x16x1xf32> to vector<2x16x16xf32>
    %30 = arith.mulf %21, %29 : vector<2x16x16xf32>
    %cst_21 = arith.constant 0.000000e+00 : f32
    %31 = vector.broadcast %cst_21 : f32 to vector<2x16x16xf32>
    %32 = arith.select %28, %30, %31 : vector<2x16x16xi1>, vector<2x16x16xf32>
    "tpu.trace_start"() <{level = 10 : i32, message = "bij,bjk->bik"}> : () -> ()
    %cst_22 = arith.constant dense<0.000000e+00> : vector<2x16x32xf32>
    %33 = tpu.matmul %32, %13, %cst_22 {dimension_numbers = #tpu.dot_dimension_numbers<[2], [1], [1], [2], [0, 0, 0, 1, 1, 2], [0], [0]>} : vector<2x16x16xf32>, vector<2x16x32xf32>, vector<2x16x32xf32> -> vector<2x16x32xf32>
    "tpu.trace_stop"() : () -> ()
    %c0_23 = arith.constant 0 : index
    %c0_24 = arith.constant 0 : index
    %c0_25 = arith.constant 0 : index
    %34 = vector.load %arg7[%c0_23, %c0_24, %c0_25] : memref<2x16x32xf32, #tpu.memory_space<vmem>>, vector<2x16x32xf32>
    tpu.vector_store %arg7[%c0_23, %c0_24, %c0_25], %33 {strides = array<i32>} : memref<2x16x32xf32, #tpu.memory_space<vmem>>, vector<2x16x32xf32>,
    return
  }
}

</mosaic_0001>

<llo_original>
// kernel: tpu_custom_call.1
$region0: #{tpu_custom_call.1}
  #allocation0 [shape = 'u32[]', space=smem, size = 0x4, offset = 0x4, fixed_abs, tag = 'smem constant byte address 0x4 - core index']
  #allocation1 [shape = 'u32[144,128]{1,0:T(1,128)}', space=vmem, size = 0x12000, scoped, tag = 'internal scratch']
  %s0 = inlined_call_operand.hbm [shape: f32[32,32], index: 0, kind: input, shape index: {}]
  %s1 = inlined_call_operand.hbm [shape: f32[32,32], index: 1, kind: input, shape index: {}]
  %s2 = inlined_call_operand.hbm [shape: f32[32,32], index: 2, kind: input, shape index: {}]
  %s3 = inlined_call_operand.vmem [shape: f32[1,32], index: 3, kind: input, shape index: {}]
  %s4 = inlined_call_operand.hbm [shape: f32[32,32], index: 4, kind: input, shape index: {}]
  %s5 = inlined_call_operand.vmem [shape: f32[1,32], index: 5, kind: input, shape index: {}]
  %s6 = inlined_call_operand.hbm [shape: f32[2,16,16], index: 6, kind: input, shape index: {}]
  %s7 = inlined_call_operand.hbm [shape: f32[2,16,32], index: 7, kind: output, shape index: {}]
  %s8 = sld [smem:[#allocation0]]
  $region58: #{tpu_custom_call.1} parent=0
    _
  %s10 = ssub.s32 1, %s8
  %s11 = scalar_select 0, %s10, %s8
  $region1: #{tpu_custom_call.1} parent=0
    #allocation2 [shape = 'u8[16384]{0}', space=vmem, size = 0x4000, scoped, tag = 'input window, operand 0, single buffered']
    #allocation3 [shape = 's32[1]{0}', space=sflag, size = 0x4, scoped, tag = 'scoped memory for tpu_custom_call.1']
    #allocation4 [shape = 's32[1]{0}', space=sflag, size = 0x4, scoped, tag = 'scoped memory for tpu_custom_call.1']
    #allocation5 [shape = 'u8[16384]{0}', space=vmem, size = 0x4000, scoped, tag = 'input window, operand 1, single buffered']
    #allocation6 [shape = 's32[1]{0}', space=sflag, size = 0x4, scoped, tag = 'scoped memory for tpu_custom_call.1']
    #allocation7 [shape = 'u8[16384]{0}', space=vmem, size = 0x4000, scoped, tag = 'input window, operand 2, single buffered']
    #allocation8 [shape = 'u8[16384]{0}', space=vmem, size = 0x4000, scoped, tag = 'input window, operand 4, single buffered']
    #allocation9 [shape = 's32[1]{0}', space=sflag, size = 0x4, scoped, tag = 'scoped memory for tpu_custom_call.1']
    #allocation10 [shape = 'u8[16384]{0}', space=vmem, size = 0x4000, scoped, tag = 'input window, operand 6, single buffered']
    #allocation11 [shape = 'u8[16384]{0}', space=vmem, size = 0x4000, scoped, tag = 'output window, operand 0, single buffered']
    %12 = vsyncpa [#allocation3], 0
    %13 = vsyncpa [#allocation6], 0
    %14 = vsyncpa [#allocation9], 0
    %15 = vsyncpa [#allocation4], 0
    // Predicated region
    $region2: #{tpu_custom_call.1} parent=1 // pred_check
      _
    $region3: #{tpu_custom_call.1} parent=1 // pred_check_branch
      %17 = sbr.rel (0) target = $region5
    $region4: #{tpu_custom_call.1} parent=1 // pred_region
      %s19 = ssub.s32 512, 512
      %20 = vsyncadd [#allocation3], %s19
      %s21 = sshll.u32 [#allocation2], 4
      %s22 = int_to_ptr.vmem [resolvable:$true] %s21
      %27 = dma.hbm_to_vmem [thread:$0]  %s0, 512, %s22, [#allocation3], 128, 128, 8
    $region5: #{tpu_custom_call.1} parent=1 // pred_fallthru
      _
    // Predicated region
    $region6: #{tpu_custom_call.1} parent=1 // pred_check
      _
    $region7: #{tpu_custom_call.1} parent=1 // pred_check_branch
      %29 = sbr.rel (0) target = $region9
    $region8: #{tpu_custom_call.1} parent=1 // pred_region
      %s31 = ssub.s32 512, 512
      %32 = vsyncadd [#allocation6], %s31
      %s33 = sshll.u32 [#allocation5], 4
      %s34 = int_to_ptr.vmem [resolvable:$true] %s33
      %39 = dma.hbm_to_vmem [thread:$0]  %s1, 512, %s34, [#allocation6], 128, 128, 8
    $region9: #{tpu_custom_call.1} parent=1 // pred_fallthru
      _
    // Predicated region
    $region10: #{tpu_custom_call.1} parent=1 // pred_check
      _
    $region11: #{tpu_custom_call.1} parent=1 // pred_check_branch
      %41 = sbr.rel (0) target = $region13
    $region12: #{tpu_custom_call.1} parent=1 // pred_region
      %s43 = ssub.s32 512, 512
      %44 = vsyncadd [#allocation6], %s43
      %s45 = sshll.u32 [#allocation7], 4
      %s46 = int_to_ptr.vmem [resolvable:$true] %s45
      %51 = dma.hbm_to_vmem [thread:$0]  %s2, 512, %s46, [#allocation6], 128, 128, 8
    $region13: #{tpu_custom_call.1} parent=1 // pred_fallthru
      _
    // Predicated region
    $region14: #{tpu_custom_call.1} parent=1 // pred_check
      _
    $region15: #{tpu_custom_call.1} parent=1 // pred_check_branch
      %53 = sbr.rel (0) target = $region17
    $region16: #{tpu_custom_call.1} parent=1 // pred_region
      _
    $region17: #{tpu_custom_call.1} parent=1 // pred_fallthru
      _
    // Predicated region
    $region18: #{tpu_custom_call.1} parent=1 // pred_check
      _
    $region19: #{tpu_custom_call.1} parent=1 // pred_check_branch
      %55 = sbr.rel (0) target = $region21
    $region20: #{tpu_custom_call.1} parent=1 // pred_region
      %s57 = ssub.s32 512, 512
      %58 = vsyncadd [#allocation9], %s57
      %s59 = sshll.u32 [#allocation8], 4
      %s60 = int_to_ptr.vmem [resolvable:$true] %s59
      %65 = dma.hbm_to_vmem [thread:$0]  %s4, 512, %s60, [#allocation9], 128, 128, 8
    $region21: #{tpu_custom_call.1} parent=1 // pred_fallthru
      _
    // Predicated region
    $region22: #{tpu_custom_call.1} parent=1 // pred_check
      _
    $region23: #{tpu_custom_call.1} parent=1 // pred_check_branch
      %67 = sbr.rel (0) target = $region25
    $region24: #{tpu_custom_call.1} parent=1 // pred_region
      _
    $region25: #{tpu_custom_call.1} parent=1 // pred_fallthru
      _
    // Predicated region
    $region26: #{tpu_custom_call.1} parent=1 // pred_check
      _
    $region27: #{tpu_custom_call.1} parent=1 // pred_check_branch
      %69 = sbr.rel (0) target = $region29
    $region28: #{tpu_custom_call.1} parent=1 // pred_region
      %s71 = ssub.s32 512, 512
      %72 = vsyncadd [#allocation9], %s71
      %s73 = sshll.u32 [#allocation10], 4
      %s74 = int_to_ptr.vmem [resolvable:$true] %s73
      %79 = dma.hbm_to_vmem [thread:$0]  %s6, 512, %s74, [#allocation9], 128, 128, 8
    $region29: #{tpu_custom_call.1} parent=1 // pred_fallthru
      _
    // Predicated region
    $region30: #{tpu_custom_call.1} parent=1 // pred_check
      _
    $region31: #{tpu_custom_call.1} parent=1 // pred_check_branch
      %81 = sbr.rel (0) target = $region33
    $region32: #{tpu_custom_call.1} parent=1 // pred_region
      %82 = dma.done [#allocation3], 512
    $region33: #{tpu_custom_call.1} parent=1 // pred_fallthru
      _
    // Predicated region
    $region34: #{tpu_custom_call.1} parent=1 // pred_check
      _
    $region35: #{tpu_custom_call.1} parent=1 // pred_check_branch
      %84 = sbr.rel (0) target = $region37
    $region36: #{tpu_custom_call.1} parent=1 // pred_region
      %85 = dma.done [#allocation6], 512
    $region37: #{tpu_custom_call.1} parent=1 // pred_fallthru
      _
    // Predicated region
    $region38: #{tpu_custom_call.1} parent=1 // pred_check
      _
    $region39: #{tpu_custom_call.1} parent=1 // pred_check_branch
      %87 = sbr.rel (0) target = $region41
    $region40: #{tpu_custom_call.1} parent=1 // pred_region
      %88 = dma.done [#allocation6], 512
    $region41: #{tpu_custom_call.1} parent=1 // pred_fallthru
      _
    // Predicated region
    $region42: #{tpu_custom_call.1} parent=1 // pred_check
      _
    $region43: #{tpu_custom_call.1} parent=1 // pred_check_branch
      %90 = sbr.rel (0) target = $region45
    $region44: #{tpu_custom_call.1} parent=1 // pred_region
      %91 = dma.done [#allocation9], 512
    $region45: #{tpu_custom_call.1} parent=1 // pred_fallthru
      _
    // Predicated region
    $region46: #{tpu_custom_call.1} parent=1 // pred_check
      _
    $region47: #{tpu_custom_call.1} parent=1 // pred_check_branch
      %93 = sbr.rel (0) target = $region49
    $region48: #{tpu_custom_call.1} parent=1 // pred_region
      %94 = dma.done [#allocation9], 512
    $region49: #{tpu_custom_call.1} parent=1 // pred_fallthru
      _
    %v95 = vld [vmem:[#allocation2] sm:$0xff]
    %v96 = vld [vmem:[#allocation2 + $0x8] sm:$0xff]
    %v97 = vld [vmem:[#allocation2 + $0x10] sm:$0xff]
    %v98 = vld [vmem:[#allocation2 + $0x18] sm:$0xff]
    %v99 = vld [vmem:[#allocation7] sm:$0xff]
    %v100 = vld [vmem:[#allocation7 + $0x8] sm:$0xff]
    %v101 = vld [vmem:[#allocation7 + $0x10] sm:$0xff]
    %v102 = vld [vmem:[#allocation7 + $0x18] sm:$0xff]
    %v103 = vld [vmem:[%s3] sm:$0x1]
    %v105 = vlaneseq
    %v106 = vshrl.u32 %v105, 7
    %v107 = vsub.s32 0, %v106
    %v108 = vrot.slane %v103, %v107
    %vm110 = vcmask 261120
    %v112 = vsel %vm110, %v95, 0
    %v115 = vsel %vm110, %v96, 0
    %v118 = vsel %vm110, %v97, 0
    %v121 = vsel %vm110, %v98, 0
    %123 = vmatprep.subr.mxu0 0.0
    %124 = vmatpush1.msra.mxu0 %v99
    %125 = vmatprep.subr.mxu0 0.0
    %126 = vmatpush1.msra.mxu0 %v100
    %127 = vmatprep.subr.mxu0 0.0
    %128 = vmatpush1.msra.mxu0 %v101
    %129 = vmatprep.subr.mxu0 0.0
    %130 = vmatpush1.msra.mxu0 %v102
    %131 = vmatprep.subr.mxu0 0.0
    %132 = vmatpush1.msra.mxu0 0.0
    %133 = vmatprep.subr.mxu0 0.0
    %134 = vmatpush1.msra.mxu0 0.0
    %135 = vmatprep.subr.mxu0 0.0
    %136 = vmatpush1.msra.mxu0 0.0
    %137 = vmatprep.subr.mxu0 0.0
    %138 = vmatpush1.msra.mxu0 0.0
    %139 = vmatprep.subr.mxu0 0.0
    %140 = vmatpush1.msra.mxu0 0.0
    %141 = vmatprep.subr.mxu0 0.0
    %142 = vmatpush1.msra.mxu0 0.0
    %143 = vmatprep.subr.mxu0 0.0
    %144 = vmatpush1.msra.mxu0 0.0
    %145 = vmatprep.subr.mxu0 0.0
    %146 = vmatpush1.msra.mxu0 0.0
    %147 = vmatprep.subr.mxu0 0.0
    %148 = vmatpush1.msra.mxu0 0.0
    %149 = vmatprep.subr.mxu0 0.0
    %150 = vmatpush1.msra.mxu0 0.0
    %151 = vmatprep.subr.mxu0 0.0
    %152 = vmatpush1.msra.mxu0 0.0
    %153 = vmatprep.subr.mxu0 0.0
    %154 = vmatpush1.msra.mxu0 0.0
    %155 = vmatprep.subr.mxu0 0.0
    %156 = vmatpush1.msra.mxu0 0.0
    %157 = vmatprep.subr.mxu0 0.0
    %158 = vmatpush1.msra.mxu0 0.0
    %159 = vmatprep.subr.mxu0 0.0
    %160 = vmatpush1.msra.mxu0 0.0
    %161 = vmatprep.subr.mxu0 0.0
    %162 = vmatpush1.msra.mxu0 0.0
    %163 = vmatprep.subr.mxu0 0.0
    %164 = vmatpush1.msra.mxu0 0.0
    %165 = vmatprep.subr.mxu0 0.0
    %166 = vmatpush1.msra.mxu0 0.0
    %167 = vmatprep.subr.mxu0 0.0
    %168 = vmatpush1.msra.mxu0 0.0
    %169 = vmatprep.subr.mxu0 0.0
    %170 = vmatpush1.msra.mxu0 0.0
    %171 = vmatprep.subr.mxu0 0.0
    %172 = vmatpush1.msra.mxu0 0.0
    %173 = vmatprep.subr.mxu0 0.0
    %174 = vmatpush1.msra.mxu0 0.0
    %175 = vmatprep.subr.mxu0 0.0
    %176 = vmatpush1.msra.mxu0 0.0
    %177 = vmatprep.subr.mxu0 0.0
    %178 = vmatpush1.msra.mxu0 0.0
    %179 = vmatprep.subr.mxu0 0.0
    %180 = vmatpush1.msra.mxu0 0.0
    %181 = vmatprep.subr.mxu0 0.0
    %182 = vmatpush1.msra.mxu0 0.0
    %183 = vmatprep.subr.mxu0 0.0
    %184 = vmatpush1.msra.mxu0 0.0
    %185 = vmatprep.subr.mxu0 0.0
    %186 = vmatpush1.msra.mxu0 0.0
    %187 = vmatprep.mubr.f32.mxu0 0.0
    %188 = vmatmul.mubr.f32.gmra.mrb[0].mxu0 %v112
    %v189 = vpop.f32.mrb[0].mxu0
    %v190 = vadd.f32 %v108, %v189
    %v191 = vpop.f32.mrb[0].mxu0
    %192 = vmatprep.mubr.f32.mxu0 0.0
    %193 = vmatmul.mubr.f32.gmra.mrb[0].mxu0 %v115
    %v194 = vpop.f32.mrb[0].mxu0
    %v195 = vadd.f32 %v108, %v194
    %v196 = vpop.f32.mrb[0].mxu0
    %197 = vmatprep.mubr.f32.mxu0 0.0
    %198 = vmatmul.mubr.f32.gmra.mrb[0].mxu0 %v118
    %v199 = vpop.f32.mrb[0].mxu0
    %v200 = vadd.f32 %v108, %v199
    %v201 = vpop.f32.mrb[0].mxu0
    %202 = vmatprep.mubr.f32.mxu0 0.0
    %203 = vmatmul.mubr.f32.gmra.mrb[0].mxu0 %v121
    %v204 = vpop.f32.mrb[0].mxu0
    %v205 = vadd.f32 %v108, %v204
    %v206 = vpop.f32.mrb[0].mxu0
    %207 = vdwg.mxu0
    %v208 = vld [vmem:[#allocation5] sm:$0xff]
    %v209 = vld [vmem:[#allocation5 + $0x8] sm:$0xff]
    %v210 = vld [vmem:[#allocation5 + $0x10] sm:$0xff]
    %v211 = vld [vmem:[#allocation5 + $0x18] sm:$0xff]
    %v212 = vld [vmem:[#allocation8] sm:$0xff]
    %v213 = vld [vmem:[#allocation8 + $0x8] sm:$0xff]
    %v214 = vld [vmem:[#allocation8 + $0x10] sm:$0xff]
    %v215 = vld [vmem:[#allocation8 + $0x18] sm:$0xff]
    %v216 = vld [vmem:[%s5] sm:$0x1]
    %v218 = vlaneseq
    %v219 = vshrl.u32 %v218, 7
    %v220 = vsub.s32 0, %v219
    %v221 = vrot.slane %v216, %v220
    %v224 = vsel %vm110, %v208, 0
    %v227 = vsel %vm110, %v209, 0
    %v230 = vsel %vm110, %v210, 0
    %v233 = vsel %vm110, %v211, 0
    %235 = vmatprep.subr.mxu0 0.0
    %236 = vmatpush1.msra.mxu0 %v212
    %237 = vmatprep.subr.mxu0 0.0
    %238 = vmatpush1.msra.mxu0 %v213
    %239 = vmatprep.subr.mxu0 0.0
    %240 = vmatpush1.msra.mxu0 %v214
    %241 = vmatprep.subr.mxu0 0.0
    %242 = vmatpush1.msra.mxu0 %v215
    %243 = vmatprep.subr.mxu0 0.0
    %244 = vmatpush1.msra.mxu0 0.0
    %245 = vmatprep.subr.mxu0 0.0
    %246 = vmatpush1.msra.mxu0 0.0
    %247 = vmatprep.subr.mxu0 0.0
    %248 = vmatpush1.msra.mxu0 0.0
    %249 = vmatprep.subr.mxu0 0.0
    %250 = vmatpush1.msra.mxu0 0.0
    %251 = vmatprep.subr.mxu0 0.0
    %252 = vmatpush1.msra.mxu0 0.0
    %253 = vmatprep.subr.mxu0 0.0
    %254 = vmatpush1.msra.mxu0 0.0
    %255 = vmatprep.subr.mxu0 0.0
    %256 = vmatpush1.msra.mxu0 0.0
    %257 = vmatprep.subr.mxu0 0.0
    %258 = vmatpush1.msra.mxu0 0.0
    %259 = vmatprep.subr.mxu0 0.0
    %260 = vmatpush1.msra.mxu0 0.0
    %261 = vmatprep.subr.mxu0 0.0
    %262 = vmatpush1.msra.mxu0 0.0
    %263 = vmatprep.subr.mxu0 0.0
    %264 = vmatpush1.msra.mxu0 0.0
    %265 = vmatprep.subr.mxu0 0.0
    %266 = vmatpush1.msra.mxu0 0.0
    %267 = vmatprep.subr.mxu0 0.0
    %268 = vmatpush1.msra.mxu0 0.0
    %269 = vmatprep.subr.mxu0 0.0
    %270 = vmatpush1.msra.mxu0 0.0
    %271 = vmatprep.subr.mxu0 0.0
    %272 = vmatpush1.msra.mxu0 0.0
    %273 = vmatprep.subr.mxu0 0.0
    %274 = vmatpush1.msra.mxu0 0.0
    %275 = vmatprep.subr.mxu0 0.0
    %276 = vmatpush1.msra.mxu0 0.0
    %277 = vmatprep.subr.mxu0 0.0
    %278 = vmatpush1.msra.mxu0 0.0
    %279 = vmatprep.subr.mxu0 0.0
    %280 = vmatpush1.msra.mxu0 0.0
    %281 = vmatprep.subr.mxu0 0.0
    %282 = vmatpush1.msra.mxu0 0.0
    %283 = vmatprep.subr.mxu0 0.0
    %284 = vmatpush1.msra.mxu0 0.0
    %285 = vmatprep.subr.mxu0 0.0
    %286 = vmatpush1.msra.mxu0 0.0
    %287 = vmatprep.subr.mxu0 0.0
    %288 = vmatpush1.msra.mxu0 0.0
    %289 = vmatprep.subr.mxu0 0.0
    %290 = vmatpush1.msra.mxu0 0.0
    %291 = vmatprep.subr.mxu0 0.0
    %292 = vmatpush1.msra.mxu0 0.0
    %293 = vmatprep.subr.mxu0 0.0
    %294 = vmatpush1.msra.mxu0 0.0
    %295 = vmatprep.subr.mxu0 0.0
    %296 = vmatpush1.msra.mxu0 0.0
    %297 = vmatprep.subr.mxu0 0.0
    %298 = vmatpush1.msra.mxu0 0.0
    %299 = vmatprep.mubr.f32.mxu0 0.0
    %300 = vmatmul.mubr.f32.gmra.mrb[0].mxu0 %v224
    %v301 = vpop.f32.mrb[0].mxu0
    %v302 = vadd.f32 %v221, %v301
    %v303 = vpop.f32.mrb[0].mxu0
    %304 = vmatprep.mubr.f32.mxu0 0.0
    %305 = vmatmul.mubr.f32.gmra.mrb[0].mxu0 %v227
    %v306 = vpop.f32.mrb[0].mxu0
    %v307 = vadd.f32 %v221, %v306
    %v308 = vpop.f32.mrb[0].mxu0
    %309 = vmatprep.mubr.f32.mxu0 0.0
    %310 = vmatmul.mubr.f32.gmra.mrb[0].mxu0 %v230
    %v311 = vpop.f32.mrb[0].mxu0
    %v312 = vadd.f32 %v221, %v311
    %v313 = vpop.f32.mrb[0].mxu0
    %314 = vmatprep.mubr.f32.mxu0 0.0
    %315 = vmatmul.mubr.f32.gmra.mrb[0].mxu0 %v233
    %v316 = vpop.f32.mrb[0].mxu0
    %v317 = vadd.f32 %v221, %v316
    %v318 = vpop.f32.mrb[0].mxu0
    %319 = vdwg.mxu0
    %v321 = vsel %vm110, %v302, 0
    %v324 = vsel %vm110, %v307, 0
    %v327 = vsel %vm110, %v190, 0
    %v330 = vsel %vm110, %v195, 0
    %332 = vmatprep.subr.mxu0 0.0
    %333 = vmatpush1.xpose.msra.mxu0 %v327
    %334 = vmatprep.subr.mxu0 0.0
    %335 = vmatpush1.xpose.msra.mxu0 %v330
    %336 = vmatprep.subr.mxu0 0.0
    %337 = vmatpush1.xpose.msra.mxu0 0.0
    %338 = vmatprep.subr.mxu0 0.0
    %339 = vmatpush1.xpose.msra.mxu0 0.0
    %340 = vmatprep.subr.mxu0 0.0
    %341 = vmatpush1.xpose.msra.mxu0 0.0
    %342 = vmatprep.subr.mxu0 0.0
    %343 = vmatpush1.xpose.msra.mxu0 0.0
    %344 = vmatprep.subr.mxu0 0.0
    %345 = vmatpush1.xpose.msra.mxu0 0.0
    %346 = vmatprep.subr.mxu0 0.0
    %347 = vmatpush1.xpose.msra.mxu0 0.0
    %348 = vmatprep.subr.mxu0 0.0
    %349 = vmatpush1.xpose.msra.mxu0 0.0
    %350 = vmatprep.subr.mxu0 0.0
    %351 = vmatpush1.xpose.msra.mxu0 0.0
    %352 = vmatprep.subr.mxu0 0.0
    %353 = vmatpush1.xpose.msra.mxu0 0.0
    %354 = vmatprep.subr.mxu0 0.0
    %355 = vmatpush1.xpose.msra.mxu0 0.0
    %356 = vmatprep.subr.mxu0 0.0
    %357 = vmatpush1.xpose.msra.mxu0 0.0
    %358 = vmatprep.subr.mxu0 0.0
    %359 = vmatpush1.xpose.msra.mxu0 0.0
    %360 = vmatprep.subr.mxu0 0.0
    %361 = vmatpush1.xpose.msra.mxu0 0.0
    %362 = vmatprep.subr.mxu0 0.0
    %363 = vmatpush1.xpose.msra.mxu0 0.0
    %364 = vmatprep.subr.mxu0 0.0
    %365 = vmatpush1.xpose.msra.mxu0 0.0
    %366 = vmatprep.subr.mxu0 0.0
    %367 = vmatpush1.xpose.msra.mxu0 0.0
    %368 = vmatprep.subr.mxu0 0.0
    %369 = vmatpush1.xpose.msra.mxu0 0.0
    %370 = vmatprep.subr.mxu0 0.0
    %371 = vmatpush1.xpose.msra.mxu0 0.0
    %372 = vmatprep.subr.mxu0 0.0
    %373 = vmatpush1.xpose.msra.mxu0 0.0
    %374 = vmatprep.subr.mxu0 0.0
    %375 = vmatpush1.xpose.msra.mxu0 0.0
    %376 = vmatprep.subr.mxu0 0.0
    %377 = vmatpush1.xpose.msra.mxu0 0.0
    %378 = vmatprep.subr.mxu0 0.0
    %379 = vmatpush1.xpose.msra.mxu0 0.0
    %380 = vmatprep.subr.mxu0 0.0
    %381 = vmatpush1.xpose.msra.mxu0 0.0
    %382 = vmatprep.subr.mxu0 0.0
    %383 = vmatpush1.xpose.msra.mxu0 0.0
    %384 = vmatprep.subr.mxu0 0.0
    %385 = vmatpush1.xpose.msra.mxu0 0.0
    %386 = vmatprep.subr.mxu0 0.0
    %387 = vmatpush1.xpose.msra.mxu0 0.0
    %388 = vmatprep.subr.mxu0 0.0
    %389 = vmatpush1.xpose.msra.mxu0 0.0
    %390 = vmatprep.subr.mxu0 0.0
    %391 = vmatpush1.xpose.msra.mxu0 0.0
    %392 = vmatprep.subr.mxu0 0.0
    %393 = vmatpush1.xpose.msra.mxu0 0.0
    %394 = vmatprep.subr.mxu0 0.0
    %395 = vmatpush1.xpose.msra.mxu0 0.0
    %396 = vmatprep.mubr.f32.mxu0 0.0
    %397 = vmatmul.mubr.f32.gmra.mrb[0].mxu0 %v321
    %v398 = vpop.f32.mrb[0].mxu0
    %v399 = vadd.f32 0.0, %v398
    %v400 = vpop.f32.mrb[0].mxu0
    %401 = vmatprep.mubr.f32.mxu0 0.0
    %402 = vmatmul.mubr.f32.gmra.mrb[0].mxu0 %v324
    %v403 = vpop.f32.mrb[0].mxu0
    %v404 = vadd.f32 0.0, %v403
    %v405 = vpop.f32.mrb[0].mxu0
    %406 = vdwg.mxu0
    %v408 = vsel %vm110, %v312, 0
    %v411 = vsel %vm110, %v317, 0
    %v414 = vsel %vm110, %v200, 0
    %v417 = vsel %vm110, %v205, 0
    %419 = vmatprep.subr.mxu0 0.0
    %420 = vmatpush1.xpose.msra.mxu0 %v414
    %421 = vmatprep.subr.mxu0 0.0
    %422 = vmatpush1.xpose.msra.mxu0 %v417
    %423 = vmatprep.subr.mxu0 0.0
    %424 = vmatpush1.xpose.msra.mxu0 0.0
    %425 = vmatprep.subr.mxu0 0.0
    %426 = vmatpush1.xpose.msra.mxu0 0.0
    %427 = vmatprep.subr.mxu0 0.0
    %428 = vmatpush1.xpose.msra.mxu0 0.0
    %429 = vmatprep.subr.mxu0 0.0
    %430 = vmatpush1.xpose.msra.mxu0 0.0
    %431 = vmatprep.subr.mxu0 0.0
    %432 = vmatpush1.xpose.msra.mxu0 0.0
    %433 = vmatprep.subr.mxu0 0.0
    %434 = vmatpush1.xpose.msra.mxu0 0.0
    %435 = vmatprep.subr.mxu0 0.0
    %436 = vmatpush1.xpose.msra.mxu0 0.0
    %437 = vmatprep.subr.mxu0 0.0
    %438 = vmatpush1.xpose.msra.mxu0 0.0
    %439 = vmatprep.subr.mxu0 0.0
    %440 = vmatpush1.xpose.msra.mxu0 0.0
    %441 = vmatprep.subr.mxu0 0.0
    %442 = vmatpush1.xpose.msra.mxu0 0.0
    %443 = vmatprep.subr.mxu0 0.0
    %444 = vmatpush1.xpose.msra.mxu0 0.0
    %445 = vmatprep.subr.mxu0 0.0
    %446 = vmatpush1.xpose.msra.mxu0 0.0
    %447 = vmatprep.subr.mxu0 0.0
    %448 = vmatpush1.xpose.msra.mxu0 0.0
    %449 = vmatprep.subr.mxu0 0.0
    %450 = vmatpush1.xpose.msra.mxu0 0.0
    %451 = vmatprep.subr.mxu0 0.0
    %452 = vmatpush1.xpose.msra.mxu0 0.0
    %453 = vmatprep.subr.mxu0 0.0
    %454 = vmatpush1.xpose.msra.mxu0 0.0
    %455 = vmatprep.subr.mxu0 0.0
    %456 = vmatpush1.xpose.msra.mxu0 0.0
    %457 = vmatprep.subr.mxu0 0.0
    %458 = vmatpush1.xpose.msra.mxu0 0.0
    %459 = vmatprep.subr.mxu0 0.0
    %460 = vmatpush1.xpose.msra.mxu0 0.0
    %461 = vmatprep.subr.mxu0 0.0
    %462 = vmatpush1.xpose.msra.mxu0 0.0
    %463 = vmatprep.subr.mxu0 0.0
    %464 = vmatpush1.xpose.msra.mxu0 0.0
    %465 = vmatprep.subr.mxu0 0.0
    %466 = vmatpush1.xpose.msra.mxu0 0.0
    %467 = vmatprep.subr.mxu0 0.0
    %468 = vmatpush1.xpose.msra.mxu0 0.0
    %469 = vmatprep.subr.mxu0 0.0
    %470 = vmatpush1.xpose.msra.mxu0 0.0
    %471 = vmatprep.subr.mxu0 0.0
    %472 = vmatpush1.xpose.msra.mxu0 0.0
    %473 = vmatprep.subr.mxu0 0.0
    %474 = vmatpush1.xpose.msra.mxu0 0.0
    %475 = vmatprep.subr.mxu0 0.0
    %476 = vmatpush1.xpose.msra.mxu0 0.0
    %477 = vmatprep.subr.mxu0 0.0
    %478 = vmatpush1.xpose.msra.mxu0 0.0
    %479 = vmatprep.subr.mxu0 0.0
    %480 = vmatpush1.xpose.msra.mxu0 0.0
    %481 = vmatprep.subr.mxu0 0.0
    %482 = vmatpush1.xpose.msra.mxu0 0.0
    %483 = vmatprep.mubr.f32.mxu0 0.0
    %484 = vmatmul.mubr.f32.gmra.mrb[0].mxu0 %v408
    %v485 = vpop.f32.mrb[0].mxu0
    %v486 = vadd.f32 0.0, %v485
    %v487 = vpop.f32.mrb[0].mxu0
    %488 = vmatprep.mubr.f32.mxu0 0.0
    %489 = vmatmul.mubr.f32.gmra.mrb[0].mxu0 %v411
    %v490 = vpop.f32.mrb[0].mxu0
    %v491 = vadd.f32 0.0, %v490
    %v492 = vpop.f32.mrb[0].mxu0
    %493 = vdwg.mxu0
    %v494 = vmul.f32 %v399, 0.03125
    %v495 = vmul.f32 %v404, 0.03125
    %v496 = vmul.f32 %v486, 0.03125
    %v497 = vmul.f32 %v491, 0.03125
    %vm498 = vcmask 130048
    %v499 = vsel %vm498, %v494, -inf
    %500 = vmax.xlane.f32.xlu0 %v499
    %v501 = vpop.xlane.xlu0 %500
    %v502 = vsel %vm498, %v495, -inf
    %503 = vmax.xlane.f32.xlu0 %v502
    %v504 = vpop.xlane.xlu0 %503
    %v505 = vsel %vm498, %v496, -inf
    %506 = vmax.xlane.f32.xlu0 %v505
    %v507 = vpop.xlane.xlu0 %506
    %v508 = vsel %vm498, %v497, -inf
    %509 = vmax.xlane.f32.xlu0 %v508
    %v510 = vpop.xlane.xlu0 %509
    %v511 = vsub.f32 %v494, %v501
    %v512 = vsub.f32 %v495, %v504
    %v513 = vsub.f32 %v496, %v507
    %v514 = vsub.f32 %v497, %v510
    %v515 = vmul.f32 %v511, 1.442695
    %v516 = vpow.pop %v515
    %v517 = vmul.f32 %v512, 1.442695
    %v518 = vpow.pop %v517
    %v519 = vmul.f32 %v513, 1.442695
    %v520 = vpow.pop %v519
    %v521 = vmul.f32 %v514, 1.442695
    %v522 = vpow.pop %v521
    %v523 = vsel %vm498, %v516, 0.0
    %524 = vadd.xlane.f32.xlu0 %v523
    %v525 = vpop.xlane.xlu0 %524
    %v526 = vsel %vm498, %v518, 0.0
    %527 = vadd.xlane.f32.xlu0 %v526
    %v528 = vpop.xlane.xlu0 %527
    %v529 = vsel %vm498, %v520, 0.0
    %530 = vadd.xlane.f32.xlu0 %v529
    %v531 = vpop.xlane.xlu0 %530
    %v532 = vsel %vm498, %v522, 0.0
    %533 = vadd.xlane.f32.xlu0 %v532
    %v534 = vpop.xlane.xlu0 %533
    %v535 = vrcp.pop %v525
    %v536 = vmul.f32 1.25, %v535
    %v537 = vrcp.pop %v528
    %v538 = vmul.f32 1.25, %v537
    %v539 = vrcp.pop %v531
    %v540 = vmul.f32 1.25, %v539
    %v541 = vrcp.pop %v534
    %v542 = vmul.f32 1.25, %v541
    %v543 = vld [vmem:[#allocation10] sm:$0xff]
    %v544 = vld [vmem:[#allocation10 + $0x8] sm:$0xff]
    %v545 = vld [vmem:[#allocation10 + $0x10] sm:$0xff]
    %v546 = vld [vmem:[#allocation10 + $0x18] sm:$0xff]
    %vm547 = vcmp.ge.f32.partialorder %v543, 0.2
    %vm548 = vcmp.ge.f32.partialorder %v544, 0.2
    %vm549 = vcmp.ge.f32.partialorder %v545, 0.2
    %vm550 = vcmp.ge.f32.partialorder %v546, 0.2
    %v551 = vmul.f32 %v516, %v536
    %v552 = vmul.f32 %v518, %v538
    %v553 = vmul.f32 %v520, %v540
    %v554 = vmul.f32 %v522, %v542
    %v555 = vsel %vm547, %v551, 0.0
    %v556 = vsel %vm548, %v552, 0.0
    %v557 = vsel %vm549, %v553, 0.0
    %v558 = vsel %vm550, %v554, 0.0
    %v560 = vsel %vm498, %v555, 0
    %v563 = vsel %vm498, %v556, 0
    %565 = vmatprep.subr.mxu0 0.0
    %566 = vmatpush1.msra.mxu0 %v302
    %567 = vmatprep.subr.mxu0 0.0
    %568 = vmatpush1.msra.mxu0 %v307
    %569 = vmatprep.subr.mxu0 0.0
    %570 = vmatpush1.msra.mxu0 0.0
    %571 = vmatprep.subr.mxu0 0.0
    %572 = vmatpush1.msra.mxu0 0.0
    %573 = vmatprep.subr.mxu0 0.0
    %574 = vmatpush1.msra.mxu0 0.0
    %575 = vmatprep.subr.mxu0 0.0
    %576 = vmatpush1.msra.mxu0 0.0
    %577 = vmatprep.subr.mxu0 0.0
    %578 = vmatpush1.msra.mxu0 0.0
    %579 = vmatprep.subr.mxu0 0.0
    %580 = vmatpush1.msra.mxu0 0.0
    %581 = vmatprep.subr.mxu0 0.0
    %582 = vmatpush1.msra.mxu0 0.0
    %583 = vmatprep.subr.mxu0 0.0
    %584 = vmatpush1.msra.mxu0 0.0
    %585 = vmatprep.subr.mxu0 0.0
    %586 = vmatpush1.msra.mxu0 0.0
    %587 = vmatprep.subr.mxu0 0.0
    %588 = vmatpush1.msra.mxu0 0.0
    %589 = vmatprep.subr.mxu0 0.0
    %590 = vmatpush1.msra.mxu0 0.0
    %591 = vmatprep.subr.mxu0 0.0
    %592 = vmatpush1.msra.mxu0 0.0
    %593 = vmatprep.subr.mxu0 0.0
    %594 = vmatpush1.msra.mxu0 0.0
    %595 = vmatprep.subr.mxu0 0.0
    %596 = vmatpush1.msra.mxu0 0.0
    %597 = vmatprep.subr.mxu0 0.0
    %598 = vmatpush1.msra.mxu0 0.0
    %599 = vmatprep.subr.mxu0 0.0
    %600 = vmatpush1.msra.mxu0 0.0
    %601 = vmatprep.subr.mxu0 0.0
    %602 = vmatpush1.msra.mxu0 0.0
    %603 = vmatprep.subr.mxu0 0.0
    %604 = vmatpush1.msra.mxu0 0.0
    %605 = vmatprep.subr.mxu0 0.0
    %606 = vmatpush1.msra.mxu0 0.0
    %607 = vmatprep.subr.mxu0 0.0
    %608 = vmatpush1.msra.mxu0 0.0
    %609 = vmatprep.subr.mxu0 0.0
    %610 = vmatpush1.msra.mxu0 0.0
    %611 = vmatprep.subr.mxu0 0.0
    %612 = vmatpush1.msra.mxu0 0.0
    %613 = vmatprep.subr.mxu0 0.0
    %614 = vmatpush1.msra.mxu0 0.0
    %615 = vmatprep.subr.mxu0 0.0
    %616 = vmatpush1.msra.mxu0 0.0
    %617 = vmatprep.subr.mxu0 0.0
    %618 = vmatpush1.msra.mxu0 0.0
    %619 = vmatprep.subr.mxu0 0.0
    %620 = vmatpush1.msra.mxu0 0.0
    %621 = vmatprep.subr.mxu0 0.0
    %622 = vmatpush1.msra.mxu0 0.0
    %623 = vmatprep.subr.mxu0 0.0
    %624 = vmatpush1.msra.mxu0 0.0
    %625 = vmatprep.subr.mxu0 0.0
    %626 = vmatpush1.msra.mxu0 0.0
    %627 = vmatprep.subr.mxu0 0.0
    %628 = vmatpush1.msra.mxu0 0.0
    %629 = vmatprep.mubr.f32.mxu0 0.0
    %630 = vmatmul.mubr.f32.gmra.mrb[0].mxu0 %v560
    %v631 = vpop.f32.mrb[0].mxu0
    %v632 = vadd.f32 0.0, %v631
    %v633 = vpop.f32.mrb[0].mxu0
    %634 = vmatprep.mubr.f32.mxu0 0.0
    %635 = vmatmul.mubr.f32.gmra.mrb[0].mxu0 %v563
    %v636 = vpop.f32.mrb[0].mxu0
    %v637 = vadd.f32 0.0, %v636
    %v638 = vpop.f32.mrb[0].mxu0
    %639 = vdwg.mxu0
    %v641 = vsel %vm498, %v557, 0
    %v644 = vsel %vm498, %v558, 0
    %646 = vmatprep.subr.mxu0 0.0
    %647 = vmatpush1.msra.mxu0 %v312
    %648 = vmatprep.subr.mxu0 0.0
    %649 = vmatpush1.msra.mxu0 %v317
    %650 = vmatprep.subr.mxu0 0.0
    %651 = vmatpush1.msra.mxu0 0.0
    %652 = vmatprep.subr.mxu0 0.0
    %653 = vmatpush1.msra.mxu0 0.0
    %654 = vmatprep.subr.mxu0 0.0
    %655 = vmatpush1.msra.mxu0 0.0
    %656 = vmatprep.subr.mxu0 0.0
    %657 = vmatpush1.msra.mxu0 0.0
    %658 = vmatprep.subr.mxu0 0.0
    %659 = vmatpush1.msra.mxu0 0.0
    %660 = vmatprep.subr.mxu0 0.0
    %661 = vmatpush1.msra.mxu0 0.0
    %662 = vmatprep.subr.mxu0 0.0
    %663 = vmatpush1.msra.mxu0 0.0
    %664 = vmatprep.subr.mxu0 0.0
    %665 = vmatpush1.msra.mxu0 0.0
    %666 = vmatprep.subr.mxu0 0.0
    %667 = vmatpush1.msra.mxu0 0.0
    %668 = vmatprep.subr.mxu0 0.0
    %669 = vmatpush1.msra.mxu0 0.0
    %670 = vmatprep.subr.mxu0 0.0
    %671 = vmatpush1.msra.mxu0 0.0
    %672 = vmatprep.subr.mxu0 0.0
    %673 = vmatpush1.msra.mxu0 0.0
    %674 = vmatprep.subr.mxu0 0.0
    %675 = vmatpush1.msra.mxu0 0.0
    %676 = vmatprep.subr.mxu0 0.0
    %677 = vmatpush1.msra.mxu0 0.0
    %678 = vmatprep.subr.mxu0 0.0
    %679 = vmatpush1.msra.mxu0 0.0
    %680 = vmatprep.subr.mxu0 0.0
    %681 = vmatpush1.msra.mxu0 0.0
    %682 = vmatprep.subr.mxu0 0.0
    %683 = vmatpush1.msra.mxu0 0.0
    %684 = vmatprep.subr.mxu0 0.0
    %685 = vmatpush1.msra.mxu0 0.0
    %686 = vmatprep.subr.mxu0 0.0
    %687 = vmatpush1.msra.mxu0 0.0
    %688 = vmatprep.subr.mxu0 0.0
    %689 = vmatpush1.msra.mxu0 0.0
    %690 = vmatprep.subr.mxu0 0.0
    %691 = vmatpush1.msra.mxu0 0.0
    %692 = vmatprep.subr.mxu0 0.0
    %693 = vmatpush1.msra.mxu0 0.0
    %694 = vmatprep.subr.mxu0 0.0
    %695 = vmatpush1.msra.mxu0 0.0
    %696 = vmatprep.subr.mxu0 0.0
    %697 = vmatpush1.msra.mxu0 0.0
    %698 = vmatprep.subr.mxu0 0.0
    %699 = vmatpush1.msra.mxu0 0.0
    %700 = vmatprep.subr.mxu0 0.0
    %701 = vmatpush1.msra.mxu0 0.0
    %702 = vmatprep.subr.mxu0 0.0
    %703 = vmatpush1.msra.mxu0 0.0
    %704 = vmatprep.subr.mxu0 0.0
    %705 = vmatpush1.msra.mxu0 0.0
    %706 = vmatprep.subr.mxu0 0.0
    %707 = vmatpush1.msra.mxu0 0.0
    %708 = vmatprep.subr.mxu0 0.0
    %709 = vmatpush1.msra.mxu0 0.0
    %710 = vmatprep.mubr.f32.mxu0 0.0
    %711 = vmatmul.mubr.f32.gmra.mrb[0].mxu0 %v641
    %v712 = vpop.f32.mrb[0].mxu0
    %v713 = vadd.f32 0.0, %v712
    %v714 = vpop.f32.mrb[0].mxu0
    %715 = vmatprep.mubr.f32.mxu0 0.0
    %716 = vmatmul.mubr.f32.gmra.mrb[0].mxu0 %v644
    %v717 = vpop.f32.mrb[0].mxu0
    %v718 = vadd.f32 0.0, %v717
    %v719 = vpop.f32.mrb[0].mxu0
    %720 = vdwg.mxu0
    %721 = vst.msk [vmem:[#allocation11] sm:$0xff] %vm110, %v632
    %722 = vst.msk [vmem:[#allocation11 + $0x8] sm:$0xff] %vm110, %v637
    %723 = vst.msk [vmem:[#allocation11 + $0x10] sm:$0xff] %vm110, %v713
    %724 = vst.msk [vmem:[#allocation11 + $0x18] sm:$0xff] %vm110, %v718
    // Predicated region
    $region50: #{tpu_custom_call.1} parent=1 // pred_check
      _
    $region51: #{tpu_custom_call.1} parent=1 // pred_check_branch
      %726 = sbr.rel (0) target = $region53
    $region52: #{tpu_custom_call.1} parent=1 // pred_region
      %s728 = ssub.s32 512, 512
      %729 = vsyncadd [#allocation4], %s728
      %s730 = sshll.u32 [#allocation11], 4
      %s731 = int_to_ptr.vmem [resolvable:$true] %s730
      %736 = dma.vmem_to_hbm [thread:$0]  %s731, 512, %s7, [#allocation4], 128, 128, 8
    $region53: #{tpu_custom_call.1} parent=1 // pred_fallthru
      _
    // Predicated region
    $region54: #{tpu_custom_call.1} parent=1 // pred_check
      _
    $region55: #{tpu_custom_call.1} parent=1 // pred_check_branch
      %738 = sbr.rel (0) target = $region57
    $region56: #{tpu_custom_call.1} parent=1 // pred_region
      %739 = dma.done [#allocation4], 512
    $region57: #{tpu_custom_call.1} parent=1 // pred_fallthru
      _
    %740 = vsyncpa [#allocation3], 1
    %741 = vsyncpa [#allocation6], 1
    %742 = vsyncpa [#allocation9], 1
    %743 = vsyncpa [#allocation4], 1

</llo_original>
